<compile_context>
chip_gen: v6e
topology: v6e:2x2x1
jax: 0.10.0
libtpu: 0.0.40
codegen_flags: <defaults>
</compile_context>

<pallas_src>
import functools

import jax
import jax.numpy as jnp
from jax.experimental import pallas as pl
from jax.experimental.pallas import tpu as pltpu

LANE = 128  # lane width: keep last dims lane-dense


def _round_up(x, m):
    return ((x + m - 1) // m) * m


def _vmem_limit_bytes():
    """Generation-aware scoped-VMEM cap (~half the per-core capacity)."""
    cap = 128 * 1024 * 1024
    try:
        cap = int(getattr(pltpu.get_tpu_info(), "vmem_capacity_bytes", cap))
    except Exception:
        pass
    return max(16 * 1024 * 1024, min(cap // 2, 96 * 1024 * 1024))


VMEM_LIMIT = _vmem_limit_bytes()


# ---------------------------------------------------------------------------
# Kernel 1: row-panel matmul with full-K panels and a fully-resident skinny RHS.
#   O[i] = A_panel_i @ B        (no K-tiling, no accumulator scratch, no pl.when)
# A is stored bf16 (exact for a {0,1} adjacency -> half the HBM read of the
# dominant N x N stream); it is upcast on the VPU and accumulated in f32.
# ---------------------------------------------------------------------------
def _panel_matmul_kernel(a_ref, b_ref, o_ref):
    o_ref[...] = jnp.dot(a_ref[...].astype(jnp.float32), b_ref[...],
                         preferred_element_type=jnp.float32)


def choose_row_panel(n, rhs_lanes, a_bytes=2, budget=None):
    """Largest row panel (multiple of 128, <= 512) whose double-buffered A panel
    + resident RHS + output panel fit the VMEM budget."""
    budget = VMEM_LIMIT // 2 if budget is None else budget
    kp = _round_up(n, LANE)
    for cand in (512, 384, 256, 128):
        tm = min(cand, kp)
        need = 2 * tm * kp * a_bytes + 2 * kp * rhs_lanes * 4 + 2 * tm * rhs_lanes * 4
        if need <= budget:
            return tm
    return 128


def prepare_adj(adj, tm):
    """Pad the adjacency ONCE (hoisted out of the sample loop) and cast to bf16
    (exact for {0,1} adjacency values)."""
    n = adj.shape[0]
    kp = _round_up(n, LANE)
    mp = _round_up(n, tm)
    return jnp.pad(adj, ((0, mp - n), (0, kp - n))).astype(jnp.bfloat16)


def adj_matmul(a_p, b, n_rows, *, tm):
    """A[:n_rows, :K] @ b.   a_p: padded [Mp, Kp] bf16 (zero-padded), b: [K, F] f32."""
    mp, kp = a_p.shape
    k, f = b.shape
    fp = _round_up(f, LANE)
    b_p = jnp.pad(b.astype(jnp.float32), ((0, kp - k), (0, fp - f)))
    out = pl.pallas_call(
        _panel_matmul_kernel,
        out_shape=jax.ShapeDtypeStruct((mp, fp), jnp.float32),
        grid_spec=pltpu.PrefetchScalarGridSpec(
            num_scalar_prefetch=0,
            grid=(mp // tm,),
            in_specs=[
                pl.BlockSpec((tm, kp), lambda i: (i, 0)),   # full-K row panel of A
                pl.BlockSpec((kp, fp), lambda i: (0, 0)),   # skinny RHS resident in VMEM
            ],
            out_specs=pl.BlockSpec((tm, fp), lambda i: (i, 0)),
        ),
        compiler_params=pltpu.CompilerParams(
            dimension_semantics=("parallel",),
            vmem_limit_bytes=VMEM_LIMIT,
        ),
    )(a_p, b_p)
    return out[:n_rows, :f]


# ---------------------------------------------------------------------------
# Kernel 2: fused MCSVD head.
#   acc = sum_s relu(emb_s @ W1 + b1) ;  out = relu((acc / nsamples) @ W2 + b2)
# Grid = (row panels, samples); the sample axis is "arbitrary" with an f32 VMEM
# accumulator (init on the first sample, lin2 epilogue on the last).
# ---------------------------------------------------------------------------
def _head_kernel(emb_ref, w1_ref, b1_ref, w2_ref, b2_ref, o_ref, acc_ref, *,
                 inv_nsamples):
    si = pl.program_id(1)

    @pl.when(si == 0)
    def _():
        acc_ref[...] = jnp.zeros_like(acc_ref)

    h = jnp.dot(emb_ref[...], w1_ref[...], preferred_element_type=jnp.float32)
    acc_ref[...] += jnp.maximum(h + b1_ref[...], 0.0)

    @pl.when(si == pl.num_programs(1) - 1)
    def _():
        xm = acc_ref[...] * inv_nsamples
        h2 = jnp.dot(xm, w2_ref[...], preferred_element_type=jnp.float32)
        o_ref[...] = jnp.maximum(h2 + b2_ref[...], 0.0)


def mcsvd_head(embs, w1, b1, w2, b2):
    """embs: [S, N, q];  w*: torch-layout [out, in];  returns [N, q]."""
    s, n, q = embs.shape
    fp = _round_up(q, LANE)
    tm = min(_round_up(n, LANE), 512)
    np_ = _round_up(n, tm)
    emb_p = jnp.pad(embs.astype(jnp.float32),
                    ((0, 0), (0, np_ - n), (0, fp - q)))
    w1_p = jnp.pad(w1.T.astype(jnp.float32), ((0, fp - q), (0, fp - q)))
    w2_p = jnp.pad(w2.T.astype(jnp.float32), ((0, fp - q), (0, fp - q)))
    b1_p = jnp.pad(b1.reshape(1, -1).astype(jnp.float32), ((0, 0), (0, fp - q)))
    b2_p = jnp.pad(b2.reshape(1, -1).astype(jnp.float32), ((0, 0), (0, fp - q)))
    out = pl.pallas_call(
        functools.partial(_head_kernel, inv_nsamples=1.0 / s),
        out_shape=jax.ShapeDtypeStruct((np_, fp), jnp.float32),
        grid_spec=pltpu.PrefetchScalarGridSpec(
            num_scalar_prefetch=0,
            grid=(np_ // tm, s),                      # sample (reduction) axis last
            in_specs=[
                pl.BlockSpec((None, tm, fp), lambda i, si: (si, i, 0)),
                pl.BlockSpec((fp, fp), lambda i, si: (0, 0)),
                pl.BlockSpec((1, fp), lambda i, si: (0, 0)),
                pl.BlockSpec((fp, fp), lambda i, si: (0, 0)),
                pl.BlockSpec((1, fp), lambda i, si: (0, 0)),
            ],
            out_specs=pl.BlockSpec((tm, fp), lambda i, si: (i, 0)),
            scratch_shapes=[pltpu.VMEM((tm, fp), jnp.float32)],
        ),
        compiler_params=pltpu.CompilerParams(
            dimension_semantics=("parallel", "arbitrary"),
            vmem_limit_bytes=VMEM_LIMIT,
        ),
    )(emb_p, w1_p, b1_p, w2_p, b2_p)
    return out[:n, :q]


# ---------------------------------------------------------------------------
# Plain-XLA references (correctness cross-checks only)
# ---------------------------------------------------------------------------
def _matmul_ref(a, b):
    return jnp.matmul(a, b, precision=jax.lax.Precision.HIGHEST)


def _head_ref(embs, w1, b1, w2, b2):
    acc = jnp.zeros((embs.shape[1], w1.shape[0]), jnp.float32)
    for si in range(embs.shape[0]):
        acc = acc + jnp.maximum(_matmul_ref(embs[si], w1.T) + b1, 0.0)
    acc = acc / embs.shape[0]
    return jnp.maximum(_matmul_ref(acc, w2.T) + b2, 0.0)


# ---------------------------------------------------------------------------
# Monte-Carlo low-rank SVD stage (batched over samples, A kept fixed)
# ---------------------------------------------------------------------------
def mcsvd_embeddings(adj, q, nsamples, niter, key):
    """Per-sample embeddings [S, N, q] (already mapped back by each sample's
    inverse permutation), mirroring torch.svd_lowrank(q, niter) on the
    (cumulatively) permuted adjacency.  The [N,N] matrix is never permuted or
    transposed: it is symmetric, so A'^T == A', and P A P^T v = (A v[inv])[perm]
    is applied to the skinny [N,q] factors only."""
    n = adj.shape[0]
    s = nsamples
    fp = _round_up(s * q, LANE)
    tm = choose_row_panel(n, fp)
    a_p = prepare_adj(adj, tm)               # padded + bf16 ONCE for all samples/stages

    # Per-sample permutations with the reference's cumulative semantics:
    # adj_t is re-permuted every sample, but only the *current* sample's inverse
    # is applied to the embedding.
    keys = jax.random.split(key, 2 * s)
    perms, cums = [], []
    cum = jnp.arange(n)
    for i in range(s):
        p = jax.random.permutation(keys[2 * i], n)
        perms.append(p)
        cum = cum[p]                          # cumulative permutation of the adjacency
        cums.append(cum)
    perm = jnp.stack(perms)                   # [S, N]
    cum = jnp.stack(cums)                     # [S, N]
    inv_cum = jnp.argsort(cum, axis=1)
    inv_perm = jnp.argsort(perm, axis=1)

    gather = jax.vmap(lambda v, idx: v[idx])  # per-sample row gather on [N, q]

    def a_apply(v):                           # v: [S, N, q]  ->  A'_s @ v_s, batched
        w = gather(v, inv_cum)                                   # P^T v  (skinny gather)
        rhs = jnp.transpose(w, (1, 0, 2)).reshape(n, s * q)      # one [N, S*q] RHS
        y = adj_matmul(a_p, rhs, n, tm=tm)                       # A streams from HBM once
        y = jnp.transpose(y.reshape(n, s, q), (1, 0, 2))
        return gather(y, cum)                                    # P (A P^T v)

    # TODO(synk): QR has no Pallas equivalent; runs via jnp.linalg.qr (XLA).
    qr_q = jax.vmap(lambda m: jnp.linalg.qr(m)[0])

    r = jnp.stack([jax.random.normal(keys[2 * i + 1], (n, q), jnp.float32)
                   for i in range(s)])                           # [S, N, q]
    q_mat = qr_q(a_apply(r))                  # get_approximate_basis(A'^T == A', q)
    for _ in range(niter):
        q_mat = qr_q(a_apply(q_mat))
        q_mat = qr_q(a_apply(q_mat))
    b_t = a_apply(q_mat)                      # [S, N, q]
    # TODO(synk): the small [N,q] SVD runs via jnp.linalg.svd (XLA), no Pallas equivalent.
    u = jax.vmap(lambda m: jnp.linalg.svd(m, full_matrices=False)[0])(b_t)
    return gather(u, inv_perm)                # embedding = U[inv_perm] per sample


def mcsvd_forward(x, adj, w1, b1, w2, b2, key, *, nsamples=1, niter=1):
    """MCSVD.forward.  `x` is unused — the reference module overwrites it with 0.
    Assumes `adj` is symmetric (undirected graph); guarded in __main__."""
    del x
    q = w1.shape[0]
    embs = mcsvd_embeddings(adj, q, nsamples, niter, key)
    return mcsvd_head(embs, w1, b1, w2, b2)


# ---------------------------------------------------------------------------
if __name__ == "__main__":
    N = 256          # num_nodes
    OUT_C = 16       # out_channels == low-rank q
    NSAMPLES = 2
    NITER = 1        # torch.svd_lowrank(..., niter=1)

    key = jax.random.PRNGKey(0)
    k_adj, k_x, k_w1, k_b1, k_w2, k_b2, k_fwd, k_emb = jax.random.split(key, 8)

    # dense symmetric {0,1} adjacency (the sparse adj_t materialized densely)
    a_rand = (jax.random.uniform(k_adj, (N, N)) < 0.08).astype(jnp.float32)
    adj = jnp.maximum(a_rand, a_rand.T)
    # Guard: the permuted-skinny-factor / no-transpose path requires symmetry.
    assert bool(jnp.allclose(adj, adj.T)), "MCSVD Pallas path requires a symmetric adjacency"

    x_dummy = jax.random.normal(k_x, (N, OUT_C), jnp.float32)   # ignored by forward

    # torch.nn.Linear(OUT_C, OUT_C) default init (weight [out, in], bias [out])
    bound = float(OUT_C) ** -0.5
    w1 = jax.random.uniform(k_w1, (OUT_C, OUT_C), jnp.float32, -bound, bound)
    b1 = jax.random.uniform(k_b1, (OUT_C,), jnp.float32, -bound, bound)
    w2 = jax.random.uniform(k_w2, (OUT_C, OUT_C), jnp.float32, -bound, bound)
    b2 = jax.random.uniform(k_b2, (OUT_C,), jnp.float32, -bound, bound)

    # ---- building-block checks against XLA (HIGHEST precision) --------------
    tm = choose_row_panel(N, LANE)
    a_p = prepare_adj(adj, tm)
    mm = adj_matmul(a_p, x_dummy, N, tm=tm)
    assert jnp.allclose(mm, _matmul_ref(adj, x_dummy), atol=1e-3, rtol=1e-3)

    embs_rand = jax.random.normal(k_emb, (NSAMPLES, N, OUT_C), jnp.float32)
    head_pl = mcsvd_head(embs_rand, w1, b1, w2, b2)
    head_ref = _head_ref(embs_rand, w1, b1, w2, b2)
    assert jnp.allclose(head_pl, head_ref, atol=1e-3, rtol=1e-3)

    # ---- full MCSVD forward (jitted, Pallas kernels) -------------------------
    fwd = jax.jit(mcsvd_forward, static_argnames=("nsamples", "niter"))
    out = fwd(x_dummy, adj, w1, b1, w2, b2, k_fwd, nsamples=NSAMPLES, niter=NITER)
    out = jax.block_until_ready(out)
    assert out.shape == (N, OUT_C), out.shape
    assert bool(jnp.all(jnp.isfinite(out)))

    print("KERNEL_OK")
</pallas_src>

<mosaic_0001>
module attributes {stable_mosaic.version = 11 : i64} {
  func.func @_panel_matmul_kernel(%arg0: i32, %arg1: memref<256x256xbf16, #tpu.memory_space<vmem>>, %arg2: memref<256x128xf32, #tpu.memory_space<vmem>>, %arg3: memref<256x128xf32, #tpu.memory_space<vmem>>) attributes {dimension_semantics = [#tpu.dimension_semantics<parallel>], iteration_bounds = array<i64: 1>, scalar_prefetch = 0 : i64, scratch_operands = 0 : i64, tpu.core_type = #tpu.core_type<tc>, window_params = [{transform_indices = @transform_0, window_bounds = array<i64: 256, 256>}, {pipeline_mode = #tpu.pipeline_mode<synchronous>, transform_indices = @transform_1, window_bounds = array<i64: 256, 128>}, {transform_indices = @transform_2, window_bounds = array<i64: 256, 128>}]} {
    %c0 = arith.constant 0 : index
    %c0_0 = arith.constant 0 : index
    %0 = vector.load %arg1[%c0, %c0_0] : memref<256x256xbf16, #tpu.memory_space<vmem>>, vector<256x256xbf16>
    %1 = arith.extf %0 : vector<256x256xbf16> to vector<256x256xf32>
    %c0_1 = arith.constant 0 : index
    %c0_2 = arith.constant 0 : index
    %2 = vector.load %arg2[%c0_1, %c0_2] : memref<256x128xf32, #tpu.memory_space<vmem>>, vector<256x128xf32>
    %cst = arith.constant dense<0.000000e+00> : vector<256x128xf32>
    %3 = tpu.matmul %1, %2, %cst {dimension_numbers = #tpu.dot_dimension_numbers<[1], [0], [0], [1], [0, 0, 1, 1], [], []>} : vector<256x256xf32>, vector<256x128xf32>, vector<256x128xf32> -> vector<256x128xf32>
    %c0_3 = arith.constant 0 : index
    %c0_4 = arith.constant 0 : index
    %4 = vector.load %arg3[%c0_3, %c0_4] : memref<256x128xf32, #tpu.memory_space<vmem>>, vector<256x128xf32>
    tpu.vector_store %arg3[%c0_3, %c0_4], %3 {strides = array<i32>} : memref<256x128xf32, #tpu.memory_space<vmem>>, vector<256x128xf32>,
    return
  }
  func.func @transform_0(%arg0: i32) -> (i32, i32) {
    %c0_i32 = arith.constant 0 : i32
    %c0_i32_0 = arith.constant 0 : i32
    return %arg0, %c0_i32 : i32, i32
  }
  func.func @transform_1(%arg0: i32) -> (i32, i32) {
    %c0_i32 = arith.constant 0 : i32
    %c0_i32_0 = arith.constant 0 : i32
    %c0_i32_1 = arith.constant 0 : i32
    return %c0_i32, %c0_i32_0 : i32, i32
  }
  func.func @transform_2(%arg0: i32) -> (i32, i32) {
    %c0_i32 = arith.constant 0 : i32
    %c0_i32_0 = arith.constant 0 : i32
    return %arg0, %c0_i32 : i32, i32
  }
}

</mosaic_0001>

<llo_original>
// kernel: tpu_custom_call.1
$region0: #{tpu_custom_call.1}
  #allocation0 [shape = 'u32[]', space=smem, size = 0x4, offset = 0x4, fixed_abs, tag = 'smem constant byte address 0x4 - core index']
  #allocation1 [shape = 'u32[144,128]{1,0:T(1,128)}', space=vmem, size = 0x12000, scoped, tag = 'internal scratch']
  %s0 = inlined_call_operand.hbm [shape: bf16[256,256], index: 0, kind: input, shape index: {}]
  %s1 = inlined_call_operand.hbm [shape: f32[256,128], index: 1, kind: input, shape index: {}]
  %s2 = inlined_call_operand.hbm [shape: f32[256,128], index: 2, kind: output, shape index: {}]
  %s3 = sld [smem:[#allocation0]]
  $region26: #{tpu_custom_call.1} parent=0
    _
  %s5 = ssub.s32 1, %s3
  %s6 = scalar_select 0, %s5, %s3
  $region1: #{tpu_custom_call.1} parent=0
    #allocation2 [shape = 'u8[131072]{0}', space=vmem, size = 0x20000, scoped, tag = 'input window, operand 0, single buffered']
    #allocation3 [shape = 's32[1]{0}', space=sflag, size = 0x4, scoped, tag = 'scoped memory for tpu_custom_call.1']
    #allocation4 [shape = 's32[1]{0}', space=sflag, size = 0x4, scoped, tag = 'scoped memory for tpu_custom_call.1']
    #allocation5 [shape = 'u8[131072]{0}', space=vmem, size = 0x20000, scoped, tag = 'input window, operand 1, single buffered']
    #allocation6 [shape = 's32[1]{0}', space=sflag, size = 0x4, scoped, tag = 'scoped memory for tpu_custom_call.1']
    #allocation7 [shape = 'u8[131072]{0}', space=vmem, size = 0x20000, scoped, tag = 'output window, operand 0, single buffered']
    %7 = vsyncpa [#allocation3], 0
    %8 = vsyncpa [#allocation6], 0
    %9 = vsyncpa [#allocation4], 0
    // Predicated region
    $region2: #{tpu_custom_call.1} parent=1 // pred_check
      _
    $region3: #{tpu_custom_call.1} parent=1 // pred_check_branch
      %11 = sbr.rel (0) target = $region5
    $region4: #{tpu_custom_call.1} parent=1 // pred_region
      %s13 = ssub.s32 4096, 4096
      %14 = vsyncadd [#allocation3], %s13
      %s15 = sshll.u32 [#allocation2], 4
      %s16 = int_to_ptr.vmem [resolvable:$true] %s15
      %21 = dma.hbm_to_vmem [thread:$0]  %s0, 4096, %s16, [#allocation3], 128, 128, 8
    $region5: #{tpu_custom_call.1} parent=1 // pred_fallthru
      _
    // Predicated region
    $region6: #{tpu_custom_call.1} parent=1 // pred_check
      _
    $region7: #{tpu_custom_call.1} parent=1 // pred_check_branch
      %23 = sbr.rel (0) target = $region9
    $region8: #{tpu_custom_call.1} parent=1 // pred_region
      %s25 = ssub.s32 4096, 4096
      %26 = vsyncadd [#allocation6], %s25
      %s27 = sshll.u32 [#allocation5], 4
      %s28 = int_to_ptr.vmem [resolvable:$true] %s27
      %33 = dma.hbm_to_vmem [thread:$0]  %s1, 4096, %s28, [#allocation6], 128, 128, 8
    $region9: #{tpu_custom_call.1} parent=1 // pred_fallthru
      _
    // Predicated region
    $region10: #{tpu_custom_call.1} parent=1 // pred_check
      _
    $region11: #{tpu_custom_call.1} parent=1 // pred_check_branch
      %35 = sbr.rel (0) target = $region13
    $region12: #{tpu_custom_call.1} parent=1 // pred_region
      %36 = dma.done [#allocation3], 4096
    $region13: #{tpu_custom_call.1} parent=1 // pred_fallthru
      _
    // Predicated region
    $region14: #{tpu_custom_call.1} parent=1 // pred_check
      _
    $region15: #{tpu_custom_call.1} parent=1 // pred_check_branch
      %38 = sbr.rel (0) target = $region17
    $region16: #{tpu_custom_call.1} parent=1 // pred_region
      %39 = dma.done [#allocation6], 4096
    $region17: #{tpu_custom_call.1} parent=1 // pred_fallthru
      _
    %v40 = vld [vmem:[#allocation2] sm:$0xff]
    %v41 = vld [vmem:[#allocation2 + $0x8] sm:$0xff]
    %v42 = vld [vmem:[#allocation2 + $0x10] sm:$0xff]
    %v43 = vld [vmem:[#allocation2 + $0x18] sm:$0xff]
    %v44 = vld [vmem:[#allocation2 + $0x20] sm:$0xff]
    %v45 = vld [vmem:[#allocation2 + $0x28] sm:$0xff]
    %v46 = vld [vmem:[#allocation2 + $0x30] sm:$0xff]
    %v47 = vld [vmem:[#allocation2 + $0x38] sm:$0xff]
    %v48 = vld [vmem:[#allocation2 + $0x40] sm:$0xff]
    %v49 = vld [vmem:[#allocation2 + $0x48] sm:$0xff]
    %v50 = vld [vmem:[#allocation2 + $0x50] sm:$0xff]
    %v51 = vld [vmem:[#allocation2 + $0x58] sm:$0xff]
    %v52 = vld [vmem:[#allocation2 + $0x60] sm:$0xff]
    %v53 = vld [vmem:[#allocation2 + $0x68] sm:$0xff]
    %v54 = vld [vmem:[#allocation2 + $0x70] sm:$0xff]
    %v55 = vld [vmem:[#allocation2 + $0x78] sm:$0xff]
    %v56 = vld [vmem:[#allocation2 + $0x80] sm:$0xff]
    %v57 = vld [vmem:[#allocation2 + $0x88] sm:$0xff]
    %v58 = vld [vmem:[#allocation2 + $0x90] sm:$0xff]
    %v59 = vld [vmem:[#allocation2 + $0x98] sm:$0xff]
    %v60 = vld [vmem:[#allocation2 + $0xa0] sm:$0xff]
    %v61 = vld [vmem:[#allocation2 + $0xa8] sm:$0xff]
    %v62 = vld [vmem:[#allocation2 + $0xb0] sm:$0xff]
    %v63 = vld [vmem:[#allocation2 + $0xb8] sm:$0xff]
    %v64 = vld [vmem:[#allocation2 + $0xc0] sm:$0xff]
    %v65 = vld [vmem:[#allocation2 + $0xc8] sm:$0xff]
    %v66 = vld [vmem:[#allocation2 + $0xd0] sm:$0xff]
    %v67 = vld [vmem:[#allocation2 + $0xd8] sm:$0xff]
    %v68 = vld [vmem:[#allocation2 + $0xe0] sm:$0xff]
    %v69 = vld [vmem:[#allocation2 + $0xe8] sm:$0xff]
    %v70 = vld [vmem:[#allocation2 + $0xf0] sm:$0xff]
    %v71 = vld [vmem:[#allocation2 + $0xf8] sm:$0xff]
    %v72 = vunpack.c.l.bf16 %v40
    %v73 = vunpack.c.h.bf16 %v40
    %v74 = vunpack.c.l.bf16 %v41
    %v75 = vunpack.c.h.bf16 %v41
    %v76 = vunpack.c.l.bf16 %v42
    %v77 = vunpack.c.h.bf16 %v42
    %v78 = vunpack.c.l.bf16 %v43
    %v79 = vunpack.c.h.bf16 %v43
    %v80 = vunpack.c.l.bf16 %v44
    %v81 = vunpack.c.h.bf16 %v44
    %v82 = vunpack.c.l.bf16 %v45
    %v83 = vunpack.c.h.bf16 %v45
    %v84 = vunpack.c.l.bf16 %v46
    %v85 = vunpack.c.h.bf16 %v46
    %v86 = vunpack.c.l.bf16 %v47
    %v87 = vunpack.c.h.bf16 %v47
    %v88 = vunpack.c.l.bf16 %v48
    %v89 = vunpack.c.h.bf16 %v48
    %v90 = vunpack.c.l.bf16 %v49
    %v91 = vunpack.c.h.bf16 %v49
    %v92 = vunpack.c.l.bf16 %v50
    %v93 = vunpack.c.h.bf16 %v50
    %v94 = vunpack.c.l.bf16 %v51
    %v95 = vunpack.c.h.bf16 %v51
    %v96 = vunpack.c.l.bf16 %v52
    %v97 = vunpack.c.h.bf16 %v52
    %v98 = vunpack.c.l.bf16 %v53
    %v99 = vunpack.c.h.bf16 %v53
    %v100 = vunpack.c.l.bf16 %v54
    %v101 = vunpack.c.h.bf16 %v54
    %v102 = vunpack.c.l.bf16 %v55
    %v103 = vunpack.c.h.bf16 %v55
    %v104 = vunpack.c.l.bf16 %v56
    %v105 = vunpack.c.h.bf16 %v56
    %v106 = vunpack.c.l.bf16 %v57
    %v107 = vunpack.c.h.bf16 %v57
    %v108 = vunpack.c.l.bf16 %v58
    %v109 = vunpack.c.h.bf16 %v58
    %v110 = vunpack.c.l.bf16 %v59
    %v111 = vunpack.c.h.bf16 %v59
    %v112 = vunpack.c.l.bf16 %v60
    %v113 = vunpack.c.h.bf16 %v60
    %v114 = vunpack.c.l.bf16 %v61
    %v115 = vunpack.c.h.bf16 %v61
    %v116 = vunpack.c.l.bf16 %v62
    %v117 = vunpack.c.h.bf16 %v62
    %v118 = vunpack.c.l.bf16 %v63
    %v119 = vunpack.c.h.bf16 %v63
    %v120 = vunpack.c.l.bf16 %v64
    %v121 = vunpack.c.h.bf16 %v64
    %v122 = vunpack.c.l.bf16 %v65
    %v123 = vunpack.c.h.bf16 %v65
    %v124 = vunpack.c.l.bf16 %v66
    %v125 = vunpack.c.h.bf16 %v66
    %v126 = vunpack.c.l.bf16 %v67
    %v127 = vunpack.c.h.bf16 %v67
    %v128 = vunpack.c.l.bf16 %v68
    %v129 = vunpack.c.h.bf16 %v68
    %v130 = vunpack.c.l.bf16 %v69
    %v131 = vunpack.c.h.bf16 %v69
    %v132 = vunpack.c.l.bf16 %v70
    %v133 = vunpack.c.h.bf16 %v70
    %v134 = vunpack.c.l.bf16 %v71
    %v135 = vunpack.c.h.bf16 %v71
    %v136 = vld [vmem:[#allocation5] sm:$0xff]
    %v137 = vld [vmem:[#allocation5 + $0x8] sm:$0xff]
    %v138 = vld [vmem:[#allocation5 + $0x10] sm:$0xff]
    %v139 = vld [vmem:[#allocation5 + $0x18] sm:$0xff]
    %v140 = vld [vmem:[#allocation5 + $0x20] sm:$0xff]
    %v141 = vld [vmem:[#allocation5 + $0x28] sm:$0xff]
    %v142 = vld [vmem:[#allocation5 + $0x30] sm:$0xff]
    %v143 = vld [vmem:[#allocation5 + $0x38] sm:$0xff]
    %v144 = vld [vmem:[#allocation5 + $0x40] sm:$0xff]
    %v145 = vld [vmem:[#allocation5 + $0x48] sm:$0xff]
    %v146 = vld [vmem:[#allocation5 + $0x50] sm:$0xff]
    %v147 = vld [vmem:[#allocation5 + $0x58] sm:$0xff]
    %v148 = vld [vmem:[#allocation5 + $0x60] sm:$0xff]
    %v149 = vld [vmem:[#allocation5 + $0x68] sm:$0xff]
    %v150 = vld [vmem:[#allocation5 + $0x70] sm:$0xff]
    %v151 = vld [vmem:[#allocation5 + $0x78] sm:$0xff]
    %v152 = vld [vmem:[#allocation5 + $0x80] sm:$0xff]
    %v153 = vld [vmem:[#allocation5 + $0x88] sm:$0xff]
    %v154 = vld [vmem:[#allocation5 + $0x90] sm:$0xff]
    %v155 = vld [vmem:[#allocation5 + $0x98] sm:$0xff]
    %v156 = vld [vmem:[#allocation5 + $0xa0] sm:$0xff]
    %v157 = vld [vmem:[#allocation5 + $0xa8] sm:$0xff]
    %v158 = vld [vmem:[#allocation5 + $0xb0] sm:$0xff]
    %v159 = vld [vmem:[#allocation5 + $0xb8] sm:$0xff]
    %v160 = vld [vmem:[#allocation5 + $0xc0] sm:$0xff]
    %v161 = vld [vmem:[#allocation5 + $0xc8] sm:$0xff]
    %v162 = vld [vmem:[#allocation5 + $0xd0] sm:$0xff]
    %v163 = vld [vmem:[#allocation5 + $0xd8] sm:$0xff]
    %v164 = vld [vmem:[#allocation5 + $0xe0] sm:$0xff]
    %v165 = vld [vmem:[#allocation5 + $0xe8] sm:$0xff]
    %v166 = vld [vmem:[#allocation5 + $0xf0] sm:$0xff]
    %v167 = vld [vmem:[#allocation5 + $0xf8] sm:$0xff]
    %168 = vmatprep.subr.mxu0 0.0
    %169 = vmatpush1.msra.mxu0 %v151
    %170 = vmatprep.subr.mxu0 0.0
    %171 = vmatpush1.msra.mxu0 %v150
    %172 = vmatprep.subr.mxu0 0.0
    %173 = vmatpush1.msra.mxu0 %v149
    %174 = vmatprep.subr.mxu0 0.0
    %175 = vmatpush1.msra.mxu0 %v148
    %176 = vmatprep.subr.mxu0 0.0
    %177 = vmatpush1.msra.mxu0 %v147
    %178 = vmatprep.subr.mxu0 0.0
    %179 = vmatpush1.msra.mxu0 %v146
    %180 = vmatprep.subr.mxu0 0.0
    %181 = vmatpush1.msra.mxu0 %v145
    %182 = vmatprep.subr.mxu0 0.0
    %183 = vmatpush1.msra.mxu0 %v144
    %184 = vmatprep.subr.mxu0 0.0
    %185 = vmatpush1.msra.mxu0 %v143
    %186 = vmatprep.subr.mxu0 0.0
    %187 = vmatpush1.msra.mxu0 %v142
    %188 = vmatprep.subr.mxu0 0.0
    %189 = vmatpush1.msra.mxu0 %v141
    %190 = vmatprep.subr.mxu0 0.0
    %191 = vmatpush1.msra.mxu0 %v140
    %192 = vmatprep.subr.mxu0 0.0
    %193 = vmatpush1.msra.mxu0 %v139
    %194 = vmatprep.subr.mxu0 0.0
    %195 = vmatpush1.msra.mxu0 %v138
    %196 = vmatprep.subr.mxu0 0.0
    %197 = vmatpush1.msra.mxu0 %v137
    %198 = vmatprep.subr.mxu0 0.0
    %199 = vmatpush1.msra.mxu0 %v136
    %200 = vmatprep.subr.mxu0 0.0
    %201 = vmatpush2.msra.mxu0 %v167
    %202 = vmatprep.subr.mxu0 0.0
    %203 = vmatpush2.msra.mxu0 %v166
    %204 = vmatprep.subr.mxu0 0.0
    %205 = vmatpush2.msra.mxu0 %v165
    %206 = vmatprep.subr.mxu0 0.0
    %207 = vmatpush2.msra.mxu0 %v164
    %208 = vmatprep.subr.mxu0 0.0
    %209 = vmatpush2.msra.mxu0 %v163
    %210 = vmatprep.subr.mxu0 0.0
    %211 = vmatpush2.msra.mxu0 %v162
    %212 = vmatprep.subr.mxu0 0.0
    %213 = vmatpush2.msra.mxu0 %v161
    %214 = vmatprep.subr.mxu0 0.0
    %215 = vmatpush2.msra.mxu0 %v160
    %216 = vmatprep.subr.mxu0 0.0
    %217 = vmatpush2.msra.mxu0 %v159
    %218 = vmatprep.subr.mxu0 0.0
    %219 = vmatpush2.msra.mxu0 %v158
    %220 = vmatprep.subr.mxu0 0.0
    %221 = vmatpush2.msra.mxu0 %v157
    %222 = vmatprep.subr.mxu0 0.0
    %223 = vmatpush2.msra.mxu0 %v156
    %224 = vmatprep.subr.mxu0 0.0
    %225 = vmatpush2.msra.mxu0 %v155
    %226 = vmatprep.subr.mxu0 0.0
    %227 = vmatpush2.msra.mxu0 %v154
    %228 = vmatprep.subr.mxu0 0.0
    %229 = vmatpush2.msra.mxu0 %v153
    %230 = vmatprep.subr.mxu0 0.0
    %231 = vmatpush2.msra.mxu0 %v152
    %232 = vmatprep.mubr.f32.mxu0 %v73
    %233 = vmatmul.mubr.f32.gmra.mxu0 %v72
    %v234 = vpop.f32.mrf.mxu0
    %v235 = vadd.f32 0.0, %v234
    %v236 = vpop.f32.mrf.mxu0
    %237 = vmatprep.mubr.f32.mxu0 %v75
    %238 = vmatmul.mubr.f32.gmra.mxu0 %v74
    %v239 = vpop.f32.mrf.mxu0
    %v240 = vadd.f32 0.0, %v239
    %v241 = vpop.f32.mrf.mxu0
    %242 = vmatprep.mubr.f32.mxu0 %v77
    %243 = vmatmul.mubr.f32.gmra.mxu0 %v76
    %v244 = vpop.f32.mrf.mxu0
    %v245 = vadd.f32 0.0, %v244
    %v246 = vpop.f32.mrf.mxu0
    %247 = vmatprep.mubr.f32.mxu0 %v79
    %248 = vmatmul.mubr.f32.gmra.mxu0 %v78
    %v249 = vpop.f32.mrf.mxu0
    %v250 = vadd.f32 0.0, %v249
    %v251 = vpop.f32.mrf.mxu0
    %252 = vmatprep.mubr.f32.mxu0 %v81
    %253 = vmatmul.mubr.f32.gmra.mxu0 %v80
    %v254 = vpop.f32.mrf.mxu0
    %v255 = vadd.f32 0.0, %v254
    %v256 = vpop.f32.mrf.mxu0
    %257 = vmatprep.mubr.f32.mxu0 %v83
    %258 = vmatmul.mubr.f32.gmra.mxu0 %v82
    %v259 = vpop.f32.mrf.mxu0
    %v260 = vadd.f32 0.0, %v259
    %v261 = vpop.f32.mrf.mxu0
    %262 = vmatprep.mubr.f32.mxu0 %v85
    %263 = vmatmul.mubr.f32.gmra.mxu0 %v84
    %v264 = vpop.f32.mrf.mxu0
    %v265 = vadd.f32 0.0, %v264
    %v266 = vpop.f32.mrf.mxu0
    %267 = vmatprep.mubr.f32.mxu0 %v87
    %268 = vmatmul.mubr.f32.gmra.mxu0 %v86
    %v269 = vpop.f32.mrf.mxu0
    %v270 = vadd.f32 0.0, %v269
    %v271 = vpop.f32.mrf.mxu0
    %272 = vmatprep.mubr.f32.mxu0 %v89
    %273 = vmatmul.mubr.f32.gmra.mxu0 %v88
    %v274 = vpop.f32.mrf.mxu0
    %v275 = vadd.f32 0.0, %v274
    %v276 = vpop.f32.mrf.mxu0
    %277 = vmatprep.mubr.f32.mxu0 %v91
    %278 = vmatmul.mubr.f32.gmra.mxu0 %v90
    %v279 = vpop.f32.mrf.mxu0
    %v280 = vadd.f32 0.0, %v279
    %v281 = vpop.f32.mrf.mxu0
    %282 = vmatprep.mubr.f32.mxu0 %v93
    %283 = vmatmul.mubr.f32.gmra.mxu0 %v92
    %v284 = vpop.f32.mrf.mxu0
    %v285 = vadd.f32 0.0, %v284
    %v286 = vpop.f32.mrf.mxu0
    %287 = vmatprep.mubr.f32.mxu0 %v95
    %288 = vmatmul.mubr.f32.gmra.mxu0 %v94
    %v289 = vpop.f32.mrf.mxu0
    %v290 = vadd.f32 0.0, %v289
    %v291 = vpop.f32.mrf.mxu0
    %292 = vmatprep.mubr.f32.mxu0 %v97
    %293 = vmatmul.mubr.f32.gmra.mxu0 %v96
    %v294 = vpop.f32.mrf.mxu0
    %v295 = vadd.f32 0.0, %v294
    %v296 = vpop.f32.mrf.mxu0
    %297 = vmatprep.mubr.f32.mxu0 %v99
    %298 = vmatmul.mubr.f32.gmra.mxu0 %v98
    %v299 = vpop.f32.mrf.mxu0
    %v300 = vadd.f32 0.0, %v299
    %v301 = vpop.f32.mrf.mxu0
    %302 = vmatprep.mubr.f32.mxu0 %v101
    %303 = vmatmul.mubr.f32.gmra.mxu0 %v100
    %v304 = vpop.f32.mrf.mxu0
    %v305 = vadd.f32 0.0, %v304
    %v306 = vpop.f32.mrf.mxu0
    %307 = vmatprep.mubr.f32.mxu0 %v103
    %308 = vmatmul.mubr.f32.gmra.mxu0 %v102
    %v309 = vpop.f32.mrf.mxu0
    %v310 = vadd.f32 0.0, %v309
    %v311 = vpop.f32.mrf.mxu0
    %312 = vmatprep.mubr.f32.mxu0 %v105
    %313 = vmatmul.mubr.f32.gmra.mxu0 %v104
    %v314 = vpop.f32.mrf.mxu0
    %v315 = vadd.f32 0.0, %v314
    %v316 = vpop.f32.mrf.mxu0
    %317 = vmatprep.mubr.f32.mxu0 %v107
    %318 = vmatmul.mubr.f32.gmra.mxu0 %v106
    %v319 = vpop.f32.mrf.mxu0
    %v320 = vadd.f32 0.0, %v319
    %v321 = vpop.f32.mrf.mxu0
    %322 = vmatprep.mubr.f32.mxu0 %v109
    %323 = vmatmul.mubr.f32.gmra.mxu0 %v108
    %v324 = vpop.f32.mrf.mxu0
    %v325 = vadd.f32 0.0, %v324
    %v326 = vpop.f32.mrf.mxu0
    %327 = vmatprep.mubr.f32.mxu0 %v111
    %328 = vmatmul.mubr.f32.gmra.mxu0 %v110
    %v329 = vpop.f32.mrf.mxu0
    %v330 = vadd.f32 0.0, %v329
    %v331 = vpop.f32.mrf.mxu0
    %332 = vmatprep.mubr.f32.mxu0 %v113
    %333 = vmatmul.mubr.f32.gmra.mxu0 %v112
    %v334 = vpop.f32.mrf.mxu0
    %v335 = vadd.f32 0.0, %v334
    %v336 = vpop.f32.mrf.mxu0
    %337 = vmatprep.mubr.f32.mxu0 %v115
    %338 = vmatmul.mubr.f32.gmra.mxu0 %v114
    %v339 = vpop.f32.mrf.mxu0
    %v340 = vadd.f32 0.0, %v339
    %v341 = vpop.f32.mrf.mxu0
    %342 = vmatprep.mubr.f32.mxu0 %v117
    %343 = vmatmul.mubr.f32.gmra.mxu0 %v116
    %v344 = vpop.f32.mrf.mxu0
    %v345 = vadd.f32 0.0, %v344
    %v346 = vpop.f32.mrf.mxu0
    %347 = vmatprep.mubr.f32.mxu0 %v119
    %348 = vmatmul.mubr.f32.gmra.mxu0 %v118
    %v349 = vpop.f32.mrf.mxu0
    %v350 = vadd.f32 0.0, %v349
    %v351 = vpop.f32.mrf.mxu0
    %352 = vmatprep.mubr.f32.mxu0 %v121
    %353 = vmatmul.mubr.f32.gmra.mxu0 %v120
    %v354 = vpop.f32.mrf.mxu0
    %v355 = vadd.f32 0.0, %v354
    %v356 = vpop.f32.mrf.mxu0
    %357 = vmatprep.mubr.f32.mxu0 %v123
    %358 = vmatmul.mubr.f32.gmra.mxu0 %v122
    %v359 = vpop.f32.mrf.mxu0
    %v360 = vadd.f32 0.0, %v359
    %v361 = vpop.f32.mrf.mxu0
    %362 = vmatprep.mubr.f32.mxu0 %v125
    %363 = vmatmul.mubr.f32.gmra.mxu0 %v124
    %v364 = vpop.f32.mrf.mxu0
    %v365 = vadd.f32 0.0, %v364
    %v366 = vpop.f32.mrf.mxu0
    %367 = vmatprep.mubr.f32.mxu0 %v127
    %368 = vmatmul.mubr.f32.gmra.mxu0 %v126
    %v369 = vpop.f32.mrf.mxu0
    %v370 = vadd.f32 0.0, %v369
    %v371 = vpop.f32.mrf.mxu0
    %372 = vmatprep.mubr.f32.mxu0 %v129
    %373 = vmatmul.mubr.f32.gmra.mxu0 %v128
    %v374 = vpop.f32.mrf.mxu0
    %v375 = vadd.f32 0.0, %v374
    %v376 = vpop.f32.mrf.mxu0
    %377 = vmatprep.mubr.f32.mxu0 %v131
    %378 = vmatmul.mubr.f32.gmra.mxu0 %v130
    %v379 = vpop.f32.mrf.mxu0
    %v380 = vadd.f32 0.0, %v379
    %v381 = vpop.f32.mrf.mxu0
    %382 = vmatprep.mubr.f32.mxu0 %v133
    %383 = vmatmul.mubr.f32.gmra.mxu0 %v132
    %v384 = vpop.f32.mrf.mxu0
    %v385 = vadd.f32 0.0, %v384
    %v386 = vpop.f32.mrf.mxu0
    %387 = vmatprep.mubr.f32.mxu0 %v135
    %388 = vmatmul.mubr.f32.gmra.mxu0 %v134
    %v389 = vpop.f32.mrf.mxu0
    %v390 = vadd.f32 0.0, %v389
    %v391 = vpop.f32.mrf.mxu0
    %392 = vdwg.mxu0
    %393 = vst [vmem:[#allocation7] sm:$0xff] %v235
    %394 = vst [vmem:[#allocation7 + $0x8] sm:$0xff] %v240
    %395 = vst [vmem:[#allocation7 + $0x10] sm:$0xff] %v245
    %396 = vst [vmem:[#allocation7 + $0x18] sm:$0xff] %v250
    %397 = vst [vmem:[#allocation7 + $0x20] sm:$0xff] %v255
    %398 = vst [vmem:[#allocation7 + $0x28] sm:$0xff] %v260
    %399 = vst [vmem:[#allocation7 + $0x30] sm:$0xff] %v265
    %400 = vst [vmem:[#allocation7 + $0x38] sm:$0xff] %v270
    %401 = vst [vmem:[#allocation7 + $0x40] sm:$0xff] %v275
    %402 = vst [vmem:[#allocation7 + $0x48] sm:$0xff] %v280
    %403 = vst [vmem:[#allocation7 + $0x50] sm:$0xff] %v285
    %404 = vst [vmem:[#allocation7 + $0x58] sm:$0xff] %v290
    %405 = vst [vmem:[#allocation7 + $0x60] sm:$0xff] %v295
    %406 = vst [vmem:[#allocation7 + $0x68] sm:$0xff] %v300
    %407 = vst [vmem:[#allocation7 + $0x70] sm:$0xff] %v305
    %408 = vst [vmem:[#allocation7 + $0x78] sm:$0xff] %v310
    %409 = vst [vmem:[#allocation7 + $0x80] sm:$0xff] %v315
    %410 = vst [vmem:[#allocation7 + $0x88] sm:$0xff] %v320
    %411 = vst [vmem:[#allocation7 + $0x90] sm:$0xff] %v325
    %412 = vst [vmem:[#allocation7 + $0x98] sm:$0xff] %v330
    %413 = vst [vmem:[#allocation7 + $0xa0] sm:$0xff] %v335
    %414 = vst [vmem:[#allocation7 + $0xa8] sm:$0xff] %v340
    %415 = vst [vmem:[#allocation7 + $0xb0] sm:$0xff] %v345
    %416 = vst [vmem:[#allocation7 + $0xb8] sm:$0xff] %v350
    %417 = vst [vmem:[#allocation7 + $0xc0] sm:$0xff] %v355
    %418 = vst [vmem:[#allocation7 + $0xc8] sm:$0xff] %v360
    %419 = vst [vmem:[#allocation7 + $0xd0] sm:$0xff] %v365
    %420 = vst [vmem:[#allocation7 + $0xd8] sm:$0xff] %v370
    %421 = vst [vmem:[#allocation7 + $0xe0] sm:$0xff] %v375
    %422 = vst [vmem:[#allocation7 + $0xe8] sm:$0xff] %v380
    %423 = vst [vmem:[#allocation7 + $0xf0] sm:$0xff] %v385
    %424 = vst [vmem:[#allocation7 + $0xf8] sm:$0xff] %v390
    // Predicated region
    $region18: #{tpu_custom_call.1} parent=1 // pred_check
      _
    $region19: #{tpu_custom_call.1} parent=1 // pred_check_branch
      %426 = sbr.rel (0) target = $region21
    $region20: #{tpu_custom_call.1} parent=1 // pred_region
      %s428 = ssub.s32 4096, 4096
      %429 = vsyncadd [#allocation4], %s428
      %s430 = sshll.u32 [#allocation7], 4
      %s431 = int_to_ptr.vmem [resolvable:$true] %s430
      %436 = dma.vmem_to_hbm [thread:$0]  %s431, 4096, %s2, [#allocation4], 128, 128, 8
    $region21: #{tpu_custom_call.1} parent=1 // pred_fallthru
      _
    // Predicated region
    $region22: #{tpu_custom_call.1} parent=1 // pred_check
      _
    $region23: #{tpu_custom_call.1} parent=1 // pred_check_branch
      %438 = sbr.rel (0) target = $region25
    $region24: #{tpu_custom_call.1} parent=1 // pred_region
      %439 = dma.done [#allocation4], 4096
    $region25: #{tpu_custom_call.1} parent=1 // pred_fallthru
      _
    %440 = vsyncpa [#allocation3], 1
    %441 = vsyncpa [#allocation6], 1
    %442 = vsyncpa [#allocation4], 1

</llo_original>
